<compile_context>
chip_gen: v7x
topology: tpu7x:2x2x1
jax: 0.10.0
libtpu: 0.0.40
codegen_flags: <defaults>
</compile_context>

<pallas_src>
import functools
import math

import jax
import jax.numpy as jnp
from jax import lax
from jax.experimental import pallas as pl
from jax.experimental.pallas import tpu as pltpu

_SQRT_HALF = 1.0 / math.sqrt(2.0)
_TANH_C = math.sqrt(2.0 / math.pi)


def _round_up(x, m):
    return ((x + m - 1) // m) * m


def _prenorm_residual_kernel(res_ref, x_ref, w_ref, b_ref, g_ref, bb_ref, o_ref,
                             *, eps, approximate_gelu, mxu_precision):
    """out = residual + GELU(LayerNorm(x) @ W^T + b) for one row tile."""
    x = x_ref[...].astype(jnp.float32)                        # (tm, H)

    # LayerNorm over the feature (lane) dimension, f32 math.
    mean = jnp.mean(x, axis=-1, keepdims=True)
    centered = x - mean
    var = jnp.mean(centered * centered, axis=-1, keepdims=True)
    normed = centered * lax.rsqrt(var + eps)
    normed = normed * g_ref[...].astype(jnp.float32) + bb_ref[...].astype(jnp.float32)

    # Dense: feed the MXU in the weight's native dtype (bf16 weights stay
    # bf16, no f32 up-cast of the operands); accumulate in f32.  For f32
    # weights the precision is pinned to HIGHEST so results match a true f32
    # reference instead of silently taking bf16-class passes.
    h = jnp.dot(normed.astype(w_ref.dtype), w_ref[...],
                preferred_element_type=jnp.float32,
                precision=mxu_precision)                      # (tm, O)
    h = h + b_ref[...].astype(jnp.float32)

    if approximate_gelu:
        # tanh-approx GELU -> EUP slot (frees the VALU); changes numerics
        # slightly vs torch's exact erf GELU, so it is opt-in.
        h = 0.5 * h * (1.0 + jnp.tanh(_TANH_C * (h + 0.044715 * h * h * h)))
    else:
        # Exact erf-based GELU (torch.nn.GELU default).
        h = 0.5 * h * (1.0 + lax.erf(h * _SQRT_HALF))

    # Residual add (dropout == Identity for p = 0.0 in the default config).
    o_ref[...] = (res_ref[...].astype(jnp.float32) + h).astype(o_ref.dtype)


def _const_spec_kwargs():
    """Single-buffer constant operands if pipeline_mode=pl.Buffered is available."""
    if not hasattr(pl, "Buffered"):
        return {}
    try:
        pl.BlockSpec((8, 128), lambda i: (0, 0), pipeline_mode=pl.Buffered(1))
    except (TypeError, ValueError):
        return {}
    return {"pipeline_mode": pl.Buffered(1)}


def normalized_residual_connection(residual, states, w_t, b, gamma, beta,
                                   *, eps=1e-12, tm=1024, approximate_gelu=False,
                                   vmem_budget_bytes=48 * 1024 * 1024):
    """Pre-normalization residual connection with a fused Linear+GELU sub-layer.

    residual: (B, S, O); states: (B, S, H); w_t: (H, O) (= Linear.weight.T,
    ideally bf16); b: (O,); gamma, beta: (H,) (LayerNorm affine over the input
    dim).  Returns (B, S, O) in residual.dtype.
    """
    B, S, H = states.shape
    O = w_t.shape[1]
    assert residual.shape == (B, S, O)
    M = B * S

    const_kw = _const_spec_kwargs()
    const_bufs = 1 if const_kw else 2

    def itemsize(a):
        return jnp.dtype(a.dtype).itemsize

    x_b, r_b, o_b, w_b = itemsize(states), itemsize(residual), itemsize(residual), itemsize(w_t)

    def vmem_estimate(tm_):
        streams = 2 * tm_ * (H * x_b + O * r_b + O * o_b)        # double-buffered tiles
        consts = const_bufs * (H * O * w_b + O * itemsize(b)
                               + H * itemsize(gamma) + H * itemsize(beta))
        temps = 3 * tm_ * max(H, O) * 4                          # f32 LN/GELU temporaries
        return streams + consts + temps

    # --- Row-tile selection -------------------------------------------------
    sub = 16 if states.dtype == jnp.bfloat16 else 8
    tm = max(sub, _round_up(int(tm), sub))
    if tm >= 256:
        tm = _round_up(tm, 256)                 # whole MXU passes on the M dim
    tm = min(tm, _round_up(M, sub))             # don't exceed the row count
    if pl.cdiv(M, tm) < 2 and M > sub:          # keep >=2 grid steps (v7x: 2 TCs)
        tm = max(sub, _round_up(pl.cdiv(M, 2), sub))
    while tm > sub and vmem_estimate(tm) > vmem_budget_bytes:
        tm = max(sub, _round_up(tm // 2, sub))  # fit the explicit VMEM budget

    grid_m = pl.cdiv(M, tm)

    footprint = vmem_estimate(tm)
    vmem_limit = None
    if footprint > 30 * 1024 * 1024:            # default 32 MiB scoped limit not enough
        vmem_limit = int(min(footprint + 8 * 1024 * 1024, 56 * 1024 * 1024))

    # --- Operand prep (no padding / slicing of the big streamed arrays) -----
    x2d = states.reshape(M, H)
    r2d = residual.reshape(M, O)
    b2d = b.reshape(1, O)
    g2d = gamma.reshape(1, H)
    bb2d = beta.reshape(1, H)

    mxu_precision = (lax.Precision.HIGHEST
                     if jnp.dtype(w_t.dtype) == jnp.float32 else None)
    kernel = functools.partial(_prenorm_residual_kernel, eps=eps,
                               approximate_gelu=approximate_gelu,
                               mxu_precision=mxu_precision)

    bytes_accessed = int(
        r2d.size * r_b + x2d.size * x_b + w_t.size * w_b
        + b2d.size * itemsize(b) + g2d.size * itemsize(gamma)
        + bb2d.size * itemsize(beta) + M * O * o_b)
    cost = pl.CostEstimate(flops=2 * M * H * O,
                           transcendentals=M * O,
                           bytes_accessed=bytes_accessed)

    cp_kwargs = dict(dimension_semantics=("parallel",))
    if vmem_limit is not None:
        cp_kwargs["vmem_limit_bytes"] = vmem_limit

    in_specs = [
        pl.BlockSpec((tm, O), lambda i: (i, 0)),               # residual tile
        pl.BlockSpec((tm, H), lambda i: (i, 0)),               # states tile
        pl.BlockSpec((H, O), lambda i: (0, 0), **const_kw),    # weight (resident)
        pl.BlockSpec((1, O), lambda i: (0, 0), **const_kw),    # bias
        pl.BlockSpec((1, H), lambda i: (0, 0), **const_kw),    # LN gamma
        pl.BlockSpec((1, H), lambda i: (0, 0), **const_kw),    # LN beta
    ]

    out2d = pl.pallas_call(
        kernel,
        out_shape=jax.ShapeDtypeStruct((M, O), residual.dtype),
        grid_spec=pltpu.PrefetchScalarGridSpec(
            num_scalar_prefetch=0,
            grid=(grid_m,),
            in_specs=in_specs,
            out_specs=pl.BlockSpec((tm, O), lambda i: (i, 0)),
        ),
        compiler_params=pltpu.CompilerParams(**cp_kwargs),
        cost_estimate=cost,
    )(r2d, x2d, w_t, b2d, g2d, bb2d)

    return out2d.reshape(B, S, O)


def _reference(residual, states, w_t, b, gamma, beta, eps=1e-12):
    """Pure-JAX reference matching the kernel's dtype path (LN/GELU in f32,
    matmul in the weight's native dtype with f32 accumulation)."""
    x = states.astype(jnp.float32)
    mean = jnp.mean(x, -1, keepdims=True)
    var = jnp.mean((x - mean) ** 2, -1, keepdims=True)
    normed = ((x - mean) * lax.rsqrt(var + eps)
              * gamma.astype(jnp.float32) + beta.astype(jnp.float32))
    h = jnp.einsum("bsh,ho->bso", normed.astype(w_t.dtype), w_t,
                   preferred_element_type=jnp.float32) + b.astype(jnp.float32)
    h = 0.5 * h * (1.0 + lax.erf(h / math.sqrt(2.0)))
    return (residual.astype(jnp.float32) + h).astype(residual.dtype)


if __name__ == "__main__":
    # Small shapes consistent with the module (residual connection => O == H).
    B, S, H = 2, 8, 32
    O = H

    key = jax.random.PRNGKey(0)
    kr, kx, kw, kb = jax.random.split(key, 4)

    residual = jax.random.normal(kr, (B, S, O), dtype=jnp.float32)
    states = jax.random.normal(kx, (B, S, H), dtype=jnp.float32)
    # Representative sub-layer params.  The weight is stored in bf16 (the
    # recommended streaming/VMEM layout); the MXU accumulates in f32.
    w_t = (jax.random.normal(kw, (H, O), dtype=jnp.float32)
           * (1.0 / math.sqrt(H))).astype(jnp.bfloat16)
    b = jax.random.normal(kb, (O,), dtype=jnp.float32) * 0.01
    gamma = jnp.ones((H,), dtype=jnp.float32)   # LayerNorm weight
    beta = jnp.zeros((H,), dtype=jnp.float32)   # LayerNorm bias

    out = normalized_residual_connection(residual, states, w_t, b, gamma, beta)
    out = jax.block_until_ready(out)

    ref = _reference(residual, states, w_t, b, gamma, beta)
    assert out.shape == (B, S, O)
    # Tolerance is intentional: both sides run the bf16-weight MXU path with
    # f32 accumulation; only summation-order differences remain.
    assert jnp.allclose(out, ref, atol=1e-3, rtol=1e-3), "mismatch vs reference"

    print("KERNEL_OK")
</pallas_src>

<mosaic_0001>
module attributes {stable_mosaic.version = 11 : i64} {
  func.func @_prenorm_residual_kernel(%arg0: i32, %arg1: memref<8x32xf32, #tpu.memory_space<vmem>>, %arg2: memref<8x32xf32, #tpu.memory_space<vmem>>, %arg3: memref<32x32xbf16, #tpu.memory_space<vmem>>, %arg4: memref<1x32xf32, #tpu.memory_space<vmem>>, %arg5: memref<1x32xf32, #tpu.memory_space<vmem>>, %arg6: memref<1x32xf32, #tpu.memory_space<vmem>>, %arg7: memref<8x32xf32, #tpu.memory_space<vmem>>) attributes {dimension_semantics = [#tpu.dimension_semantics<parallel>], iteration_bounds = array<i64: 2>, scalar_prefetch = 0 : i64, scratch_operands = 0 : i64, tpu.core_type = #tpu.core_type<tc>, window_params = [{transform_indices = @transform_0, window_bounds = array<i64: 8, 32>}, {transform_indices = @transform_1, window_bounds = array<i64: 8, 32>}, {pipeline_mode = #tpu.pipeline_mode<synchronous>, transform_indices = @transform_2, window_bounds = array<i64: 32, 32>}, {pipeline_mode = #tpu.pipeline_mode<synchronous>, transform_indices = @transform_3, window_bounds = array<i64: 1, 32>}, {pipeline_mode = #tpu.pipeline_mode<synchronous>, transform_indices = @transform_4, window_bounds = array<i64: 1, 32>}, {pipeline_mode = #tpu.pipeline_mode<synchronous>, transform_indices = @transform_5, window_bounds = array<i64: 1, 32>}, {transform_indices = @transform_6, window_bounds = array<i64: 8, 32>}]} {
    %c0 = arith.constant 0 : index
    %c0_0 = arith.constant 0 : index
    %0 = vector.load %arg2[%c0, %c0_0] : memref<8x32xf32, #tpu.memory_space<vmem>>, vector<8x32xf32>
    %cst = arith.constant dense<0.000000e+00> : vector<8xf32>
    %1 = vector.multi_reduction <add>, %0, %cst [1] : vector<8x32xf32> to vector<8xf32>
    %2 = vector.shape_cast %1 : vector<8xf32> to vector<8x1xf32>
    %cst_1 = arith.constant 3.200000e+01 : f32
    %3 = vector.broadcast %cst_1 : f32 to vector<8x1xf32>
    %4 = arith.divf %2, %3 : vector<8x1xf32>
    %5 = vector.broadcast %4 : vector<8x1xf32> to vector<8x32xf32>
    %6 = arith.subf %0, %5 : vector<8x32xf32>
    %7 = arith.mulf %6, %6 : vector<8x32xf32>
    %cst_2 = arith.constant dense<0.000000e+00> : vector<8xf32>
    %8 = vector.multi_reduction <add>, %7, %cst_2 [1] : vector<8x32xf32> to vector<8xf32>
    %9 = vector.shape_cast %8 : vector<8xf32> to vector<8x1xf32>
    %cst_3 = arith.constant 3.200000e+01 : f32
    %10 = vector.broadcast %cst_3 : f32 to vector<8x1xf32>
    %11 = arith.divf %9, %10 : vector<8x1xf32>
    %cst_4 = arith.constant 9.99999996E-13 : f32
    %12 = vector.broadcast %cst_4 : f32 to vector<8x1xf32>
    %13 = arith.addf %11, %12 : vector<8x1xf32>
    %14 = math.rsqrt %13 : vector<8x1xf32>
    %15 = vector.broadcast %14 : vector<8x1xf32> to vector<8x32xf32>
    %16 = arith.mulf %6, %15 : vector<8x32xf32>
    %c0_5 = arith.constant 0 : index
    %c0_6 = arith.constant 0 : index
    %17 = vector.load %arg5[%c0_5, %c0_6] : memref<1x32xf32, #tpu.memory_space<vmem>>, vector<1x32xf32>
    %18 = vector.broadcast %17 : vector<1x32xf32> to vector<8x32xf32>
    %19 = arith.mulf %16, %18 : vector<8x32xf32>
    %c0_7 = arith.constant 0 : index
    %c0_8 = arith.constant 0 : index
    %20 = vector.load %arg6[%c0_7, %c0_8] : memref<1x32xf32, #tpu.memory_space<vmem>>, vector<1x32xf32>
    %21 = vector.broadcast %20 : vector<1x32xf32> to vector<8x32xf32>
    %22 = arith.addf %19, %21 : vector<8x32xf32>
    %23 = arith.truncf %22 : vector<8x32xf32> to vector<8x32xbf16>
    %c0_9 = arith.constant 0 : index
    %c0_10 = arith.constant 0 : index
    %24 = vector.load %arg3[%c0_9, %c0_10] : memref<32x32xbf16, #tpu.memory_space<vmem>>, vector<32x32xbf16>
    %cst_11 = arith.constant dense<0.000000e+00> : vector<8x32xf32>
    %25 = tpu.matmul %23, %24, %cst_11 {dimension_numbers = #tpu.dot_dimension_numbers<[1], [0], [0], [1], [0, 0, 1, 1], [], []>} : vector<8x32xbf16>, vector<32x32xbf16>, vector<8x32xf32> -> vector<8x32xf32>
    %c0_12 = arith.constant 0 : index
    %c0_13 = arith.constant 0 : index
    %26 = vector.load %arg4[%c0_12, %c0_13] : memref<1x32xf32, #tpu.memory_space<vmem>>, vector<1x32xf32>
    %27 = vector.broadcast %26 : vector<1x32xf32> to vector<8x32xf32>
    %28 = arith.addf %25, %27 : vector<8x32xf32>
    %cst_14 = arith.constant 5.000000e-01 : f32
    %29 = vector.broadcast %cst_14 : f32 to vector<8x32xf32>
    %30 = arith.mulf %29, %28 : vector<8x32xf32>
    %cst_15 = arith.constant 0.707106769 : f32
    %31 = vector.broadcast %cst_15 : f32 to vector<8x32xf32>
    %32 = arith.mulf %28, %31 : vector<8x32xf32>
    %33 = math.erf %32 : vector<8x32xf32>
    %cst_16 = arith.constant 1.000000e+00 : f32
    %34 = vector.broadcast %cst_16 : f32 to vector<8x32xf32>
    %35 = arith.addf %34, %33 : vector<8x32xf32>
    %36 = arith.mulf %30, %35 : vector<8x32xf32>
    %c0_17 = arith.constant 0 : index
    %c0_18 = arith.constant 0 : index
    %37 = vector.load %arg1[%c0_17, %c0_18] : memref<8x32xf32, #tpu.memory_space<vmem>>, vector<8x32xf32>
    %38 = arith.addf %37, %36 : vector<8x32xf32>
    %c0_19 = arith.constant 0 : index
    %c0_20 = arith.constant 0 : index
    %39 = vector.load %arg7[%c0_19, %c0_20] : memref<8x32xf32, #tpu.memory_space<vmem>>, vector<8x32xf32>
    tpu.vector_store %arg7[%c0_19, %c0_20], %38 {strides = array<i32>} : memref<8x32xf32, #tpu.memory_space<vmem>>, vector<8x32xf32>,
    return
  }
  func.func @transform_0(%arg0: i32) -> (i32, i32) {
    %c0_i32 = arith.constant 0 : i32
    %c0_i32_0 = arith.constant 0 : i32
    return %arg0, %c0_i32 : i32, i32
  }
  func.func @transform_1(%arg0: i32) -> (i32, i32) {
    %c0_i32 = arith.constant 0 : i32
    %c0_i32_0 = arith.constant 0 : i32
    return %arg0, %c0_i32 : i32, i32
  }
  func.func @transform_2(%arg0: i32) -> (i32, i32) {
    %c0_i32 = arith.constant 0 : i32
    %c0_i32_0 = arith.constant 0 : i32
    %c0_i32_1 = arith.constant 0 : i32
    return %c0_i32, %c0_i32_0 : i32, i32
  }
  func.func @transform_3(%arg0: i32) -> (i32, i32) {
    %c0_i32 = arith.constant 0 : i32
    %c0_i32_0 = arith.constant 0 : i32
    %c0_i32_1 = arith.constant 0 : i32
    return %c0_i32, %c0_i32_0 : i32, i32
  }
  func.func @transform_4(%arg0: i32) -> (i32, i32) {
    %c0_i32 = arith.constant 0 : i32
    %c0_i32_0 = arith.constant 0 : i32
    %c0_i32_1 = arith.constant 0 : i32
    return %c0_i32, %c0_i32_0 : i32, i32
  }
  func.func @transform_5(%arg0: i32) -> (i32, i32) {
    %c0_i32 = arith.constant 0 : i32
    %c0_i32_0 = arith.constant 0 : i32
    %c0_i32_1 = arith.constant 0 : i32
    return %c0_i32, %c0_i32_0 : i32, i32
  }
  func.func @transform_6(%arg0: i32) -> (i32, i32) {
    %c0_i32 = arith.constant 0 : i32
    %c0_i32_0 = arith.constant 0 : i32
    return %arg0, %c0_i32 : i32, i32
  }
}

</mosaic_0001>

<llo_original>
// kernel: tpu_custom_call.1
$region0: #{tpu_custom_call.1}
  #allocation0 [shape = 'u32[]', space=smem, size = 0x4, offset = 0x4, fixed_abs, tag = 'smem constant byte address 0x4 - core index']
  #allocation1 [shape = 'u32[144,128]{1,0:T(1,128)}', space=vmem, size = 0x12000, scoped, tag = 'internal scratch']
  %s0 = inlined_call_operand.hbm [shape: f32[16,32], index: 0, kind: input, shape index: {}]
  %s1 = inlined_call_operand.hbm [shape: f32[16,32], index: 1, kind: input, shape index: {}]
  %s2 = inlined_call_operand.hbm [shape: bf16[32,32], index: 2, kind: input, shape index: {}]
  %s3 = inlined_call_operand.vmem [shape: f32[1,32], index: 3, kind: input, shape index: {}]
  %s4 = inlined_call_operand.vmem [shape: f32[1,32], index: 4, kind: input, shape index: {}]
  %s5 = inlined_call_operand.vmem [shape: f32[1,32], index: 5, kind: input, shape index: {}]
  %s6 = inlined_call_operand.hbm [shape: f32[16,32], index: 6, kind: output, shape index: {}]
  %s7 = sld [smem:[#allocation0]]
  $region69: #{tpu_custom_call.1} parent=0
    _
  %s9 = ssub.s32 1, %s7
  %s10 = scalar_select 0, %s9, %s7
  $region1: #{tpu_custom_call.1} parent=0
    #allocation2 [shape = 'u8[8192]{0}', space=vmem, size = 0x2000, scoped, tag = 'input window, operand 0']
    #allocation3 [shape = 's32[2]{0}', space=sflag, size = 0x8, scoped, tag = 'scoped memory for tpu_custom_call.1']
    #allocation4 [shape = 's32[2]{0}', space=sflag, size = 0x8, scoped, tag = 'scoped memory for tpu_custom_call.1']
    #allocation5 [shape = 'u8[8192]{0}', space=vmem, size = 0x2000, scoped, tag = 'input window, operand 1']
    #allocation6 [shape = 's32[2]{0}', space=sflag, size = 0x8, scoped, tag = 'scoped memory for tpu_custom_call.1']
    #allocation7 [shape = 'u8[8192]{0}', space=vmem, size = 0x2000, scoped, tag = 'input window, operand 2, single buffered']
    #allocation8 [shape = 'u8[8192]{0}', space=vmem, size = 0x2000, scoped, tag = 'output window, operand 0']
    %11 = vsyncpa [#allocation3], 0
    %s12 = scalar_lea.sflag [#allocation3], 1
    %13 = vsyncpa %s12, 0
    %14 = vsyncpa [#allocation6], 0
    %s15 = scalar_lea.sflag [#allocation6], 1
    %16 = vsyncpa %s15, 0
    %17 = vsyncpa [#allocation4], 0
    %s18 = scalar_lea.sflag [#allocation4], 1
    %19 = vsyncpa %s18, 0
    loop: start=0, step=1, limit=4
    $region2: #{tpu_custom_call.1} parent=1 // loop_pre_header
      _
    $region3: #{tpu_custom_call.1} parent=1 // loop_header
      %s21 = sphi 0, %s25
      %p22 = scmp.ge.s32.totalorder %s21, 4
      %s31 = sphi 0, %s33
      %s34 = sphi 0, %s31
      %s35 = sphi 0, %s34
      %s51 = sphi 0, %s35
      %s57 = sphi 0, %s59
      %s60 = sphi 0, %s57
      %s61 = sphi 0, %s60
      %s77 = sphi 0, %s61
      %s81 = sphi 0, %s81
      %s83 = sphi 0, %s81
      %s84 = sphi 0, %s83
      %s98 = sphi 0, %s84
      %s102 = sphi 0, %s102
      %s104 = sphi 0, %s102
      %s105 = sphi 0, %s104
      %s119 = sphi 0, %s105
      %s123 = sphi 0, %s123
      %s125 = sphi 0, %s123
      %s126 = sphi 0, %s125
      %s140 = sphi 0, %s126
      %s144 = sphi 0, %s144
      %s146 = sphi 0, %s144
      %s147 = sphi 0, %s146
      %s161 = sphi 0, %s147
      %s167 = sphi 0, %s169
      %s170 = sphi 0, %s167
      %s171 = sphi 0, %s170
      %s187 = sphi 0, %s171
    $region4: #{tpu_custom_call.1} parent=1 // loop_header_branch
      %24 = sbr.rel (%p22) target = $region8
    $region5: #{tpu_custom_call.1} parent=1 // loop_body
      %s26 = ssub.s32 %s21, 1
      %s27 = ssub.s32 %s21, 2
      %s28 = sadd.s32 %s21, 1
      %s29 = ssub.s32 %s21, %s28
      %p30 = scmp.eq.s32.totalorder %s29, 0
      %s32 = sadd.s32 %s31, 1
      %s33 = scalar_select %p30, %s31, %s32
      %p36 = pneg %p30
      %p37 = scmp.eq.s32.totalorder %s21, 1
      %p38 = por %p36, %p37
      %p39 = scmp.ne.s32.totalorder %s31, %s34
      %p40 = scmp.eq.s32.totalorder %s21, 0
      %p41 = por %p39, %p40
      %p42 = scmp.ne.s32.totalorder %s31, %s34
      %p43 = scmp.eq.s32.totalorder %s26, 1
      %p44 = por %p42, %p43
      %p45 = scmp.ne.s32.totalorder %s34, %s35
      %p46 = scmp.eq.s32.totalorder %s26, 0
      %p47 = por %p45, %p46
      %p48 = scmp.ne.s32.totalorder %s34, %s35
      %p49 = scmp.eq.s32.totalorder %s27, 1
      %p50 = por %p48, %p49
      %p52 = scmp.ne.s32.totalorder %s35, %s51
      %p53 = scmp.eq.s32.totalorder %s27, 0
      %p54 = por %p52, %p53
      %s55 = ssub.s32 %s21, %s28
      %p56 = scmp.eq.s32.totalorder %s55, 0
      %s58 = sadd.s32 %s57, 1
      %s59 = scalar_select %p56, %s57, %s58
      %p62 = pneg %p56
      %p63 = scmp.eq.s32.totalorder %s21, 1
      %p64 = por %p62, %p63
      %p65 = scmp.ne.s32.totalorder %s57, %s60
      %p66 = scmp.eq.s32.totalorder %s21, 0
      %p67 = por %p65, %p66
      %p68 = scmp.ne.s32.totalorder %s57, %s60
      %p69 = scmp.eq.s32.totalorder %s26, 1
      %p70 = por %p68, %p69
      %p71 = scmp.ne.s32.totalorder %s60, %s61
      %p72 = scmp.eq.s32.totalorder %s26, 0
      %p73 = por %p71, %p72
      %p74 = scmp.ne.s32.totalorder %s60, %s61
      %p75 = scmp.eq.s32.totalorder %s27, 1
      %p76 = por %p74, %p75
      %p78 = scmp.ne.s32.totalorder %s61, %s77
      %p79 = scmp.eq.s32.totalorder %s27, 0
      %p80 = por %p78, %p79
      %s82 = sadd.s32 %s81, 1
      %p85 = scmp.eq.s32.totalorder %s21, 1
      %p86 = scmp.ne.s32.totalorder %s81, %s83
      %p87 = scmp.eq.s32.totalorder %s21, 0
      %p88 = por %p86, %p87
      %p89 = scmp.ne.s32.totalorder %s81, %s83
      %p90 = scmp.eq.s32.totalorder %s26, 1
      %p91 = por %p89, %p90
      %p92 = scmp.ne.s32.totalorder %s83, %s84
      %p93 = scmp.eq.s32.totalorder %s26, 0
      %p94 = por %p92, %p93
      %p95 = scmp.ne.s32.totalorder %s83, %s84
      %p96 = scmp.eq.s32.totalorder %s27, 1
      %p97 = por %p95, %p96
      %p99 = scmp.ne.s32.totalorder %s84, %s98
      %p100 = scmp.eq.s32.totalorder %s27, 0
      %p101 = por %p99, %p100
      %s103 = sadd.s32 %s102, 1
      %p106 = scmp.eq.s32.totalorder %s21, 1
      %p107 = scmp.ne.s32.totalorder %s102, %s104
      %p108 = scmp.eq.s32.totalorder %s21, 0
      %p109 = por %p107, %p108
      %p110 = scmp.ne.s32.totalorder %s102, %s104
      %p111 = scmp.eq.s32.totalorder %s26, 1
      %p112 = por %p110, %p111
      %p113 = scmp.ne.s32.totalorder %s104, %s105
      %p114 = scmp.eq.s32.totalorder %s26, 0
      %p115 = por %p113, %p114
      %p116 = scmp.ne.s32.totalorder %s104, %s105
      %p117 = scmp.eq.s32.totalorder %s27, 1
      %p118 = por %p116, %p117
      %p120 = scmp.ne.s32.totalorder %s105, %s119
      %p121 = scmp.eq.s32.totalorder %s27, 0
      %p122 = por %p120, %p121
      %s124 = sadd.s32 %s123, 1
      %p127 = scmp.eq.s32.totalorder %s21, 1
      %p128 = scmp.ne.s32.totalorder %s123, %s125
      %p129 = scmp.eq.s32.totalorder %s21, 0
      %p130 = por %p128, %p129
      %p131 = scmp.ne.s32.totalorder %s123, %s125
      %p132 = scmp.eq.s32.totalorder %s26, 1
      %p133 = por %p131, %p132
      %p134 = scmp.ne.s32.totalorder %s125, %s126
      %p135 = scmp.eq.s32.totalorder %s26, 0
      %p136 = por %p134, %p135
      %p137 = scmp.ne.s32.totalorder %s125, %s126
      %p138 = scmp.eq.s32.totalorder %s27, 1
      %p139 = por %p137, %p138
      %p141 = scmp.ne.s32.totalorder %s126, %s140
      %p142 = scmp.eq.s32.totalorder %s27, 0
      %p143 = por %p141, %p142
      %s145 = sadd.s32 %s144, 1
      %p148 = scmp.eq.s32.totalorder %s21, 1
      %p149 = scmp.ne.s32.totalorder %s144, %s146
      %p150 = scmp.eq.s32.totalorder %s21, 0
      %p151 = por %p149, %p150
      %p152 = scmp.ne.s32.totalorder %s144, %s146
      %p153 = scmp.eq.s32.totalorder %s26, 1
      %p154 = por %p152, %p153
      %p155 = scmp.ne.s32.totalorder %s146, %s147
      %p156 = scmp.eq.s32.totalorder %s26, 0
      %p157 = por %p155, %p156
      %p158 = scmp.ne.s32.totalorder %s146, %s147
      %p159 = scmp.eq.s32.totalorder %s27, 1
      %p160 = por %p158, %p159
      %p162 = scmp.ne.s32.totalorder %s147, %s161
      %p163 = scmp.eq.s32.totalorder %s27, 0
      %p164 = por %p162, %p163
      %s165 = ssub.s32 %s21, %s28
      %p166 = scmp.eq.s32.totalorder %s165, 0
      %s168 = sadd.s32 %s167, 1
      %s169 = scalar_select %p166, %s167, %s168
      %p172 = pneg %p166
      %p173 = scmp.eq.s32.totalorder %s21, 1
      %p174 = por %p172, %p173
      %p175 = scmp.ne.s32.totalorder %s167, %s170
      %p176 = scmp.eq.s32.totalorder %s21, 0
      %p177 = por %p175, %p176
      %p178 = scmp.ne.s32.totalorder %s167, %s170
      %p179 = scmp.eq.s32.totalorder %s26, 1
      %p180 = por %p178, %p179
      %p181 = scmp.ne.s32.totalorder %s170, %s171
      %p182 = scmp.eq.s32.totalorder %s26, 0
      %p183 = por %p181, %p182
      %p184 = scmp.ne.s32.totalorder %s170, %s171
      %p185 = scmp.eq.s32.totalorder %s27, 1
      %p186 = por %p184, %p185
      %p188 = scmp.ne.s32.totalorder %s171, %s187
      %p189 = scmp.eq.s32.totalorder %s27, 0
      %p190 = por %p188, %p189
      %p191 = scmp.le.s32.totalorder 1, %s21
      %p192 = scmp.lt.s32.totalorder %s21, 3
      %p193 = pnand %p191, %p192
      %p194 = pneg %p193
      // Predicated region
      $region9: #{tpu_custom_call.1} parent=5 // pred_check
        _
      $region10: #{tpu_custom_call.1} parent=5 // pred_check_branch
        %196 = sbr.rel (%p193) target = $region12
      $region11: #{tpu_custom_call.1} parent=5 // pred_region
        %s197 = ssub.s32 %s21, 1
        // Predicated region
        $region13: #{tpu_custom_call.1} parent=11 // pred_check
          %p198 = pneg %p94
        $region14: #{tpu_custom_call.1} parent=11 // pred_check_branch
          %200 = sbr.rel (%p198) target = $region16
        $region15: #{tpu_custom_call.1} parent=11 // pred_region
          %s202 = ssub.s32 256, 256
          %203 = vsyncadd [#allocation6], %s202
          %s204 = sshll.u32 [#allocation7], 4
          %s205 = int_to_ptr.vmem [resolvable:$true] %s204
          %210 = dma.hbm_to_vmem [thread:$0]  %s2, 256, %s205, [#allocation6], 64, 64, 4
        $region16: #{tpu_custom_call.1} parent=11 // pred_fallthru
          _
        // Predicated region
        $region17: #{tpu_custom_call.1} parent=11 // pred_check
          %p211 = pneg %p115
        $region18: #{tpu_custom_call.1} parent=11 // pred_check_branch
          %213 = sbr.rel (%p211) target = $region20
        $region19: #{tpu_custom_call.1} parent=11 // pred_region
          _
        $region20: #{tpu_custom_call.1} parent=11 // pred_fallthru
          _
        // Predicated region
        $region21: #{tpu_custom_call.1} parent=11 // pred_check
          %p214 = pneg %p136
        $region22: #{tpu_custom_call.1} parent=11 // pred_check_branch
          %216 = sbr.rel (%p214) target = $region24
        $region23: #{tpu_custom_call.1} parent=11 // pred_region
          _
        $region24: #{tpu_custom_call.1} parent=11 // pred_fallthru
          _
        // Predicated region
        $region25: #{tpu_custom_call.1} parent=11 // pred_check
          %p217 = pneg %p157
        $region26: #{tpu_custom_call.1} parent=11 // pred_check_branch
          %219 = sbr.rel (%p217) target = $region28
        $region27: #{tpu_custom_call.1} parent=11 // pred_region
          _
        $region28: #{tpu_custom_call.1} parent=11 // pred_fallthru
          _
      $region12: #{tpu_custom_call.1} parent=5 // pred_fallthru
        _
      %p220 = scmp.lt.s32.totalorder %s21, 2
      // Predicated region
      $region29: #{tpu_custom_call.1} parent=5 // pred_check
        %p221 = pneg %p220
      $region30: #{tpu_custom_call.1} parent=5 // pred_check_branch
        %223 = sbr.rel (%p221) target = $region32
      $region31: #{tpu_custom_call.1} parent=5 // pred_region
        // Predicated region
        $region33: #{tpu_custom_call.1} parent=31 // pred_check
          %p224 = pneg %p41
        $region34: #{tpu_custom_call.1} parent=31 // pred_check_branch
          %226 = sbr.rel (%p224) target = $region36
        $region35: #{tpu_custom_call.1} parent=31 // pred_region
          %s227 = sand.u32 %s31, 1
          %s228 = scalar_lea.sflag [#allocation3], %s227
          %s229 = sand.u32 %s31, 1
          %s230 = smul.addr %s229, 8
          %s231 = scalar_lea.vmem [#allocation2], %s230
          %s233 = ssub.s32 128, 128
          %234 = vsyncadd %s228, %s233
          %s235 = smul.addr %s21, 128
          %s236 = scalar_lea.hbm %s0, %s235
          %s238 = sshll.u32 %s231, 4
          %s239 = int_to_ptr.vmem [resolvable:$true] %s238
          %241 = dma.hbm_to_vmem [thread:$0]  %s236, 128, %s239, %s228
        $region36: #{tpu_custom_call.1} parent=31 // pred_fallthru
          _
        // Predicated region
        $region37: #{tpu_custom_call.1} parent=31 // pred_check
          %p242 = pneg %p67
        $region38: #{tpu_custom_call.1} parent=31 // pred_check_branch
          %244 = sbr.rel (%p242) target = $region40
        $region39: #{tpu_custom_call.1} parent=31 // pred_region
          %s245 = sand.u32 %s21, 1
          %s246 = scalar_lea.sflag [#allocation6], %s245
          %s247 = sand.u32 %s57, 1
          %s248 = smul.addr %s247, 8
          %s249 = scalar_lea.vmem [#allocation5], %s248
          %s251 = ssub.s32 128, 128
          %252 = vsyncadd %s246, %s251
          %s253 = smul.addr %s21, 128
          %s254 = scalar_lea.hbm %s1, %s253
          %s256 = sshll.u32 %s249, 4
          %s257 = int_to_ptr.vmem [resolvable:$true] %s256
          %259 = dma.hbm_to_vmem [thread:$0]  %s254, 128, %s257, %s246
        $region40: #{tpu_custom_call.1} parent=31 // pred_fallthru
          _
      $region32: #{tpu_custom_call.1} parent=5 // pred_fallthru
        _
      %p260 = scmp.le.s32.totalorder 1, %s21
      %p261 = scmp.lt.s32.totalorder %s21, 3
      %p262 = pnand %p260, %p261
      %p263 = pneg %p262
      // Predicated region
      $region41: #{tpu_custom_call.1} parent=5 // pred_check
        _
      $region42: #{tpu_custom_call.1} parent=5 // pred_check_branch
        %265 = sbr.rel (%p262) target = $region44
      $region43: #{tpu_custom_call.1} parent=5 // pred_region
        %s266 = ssub.s32 %s21, 1
        %s267 = sand.u32 %s34, 1
        %s268 = scalar_lea.sflag [#allocation3], %s267
        %s269 = sand.u32 %s34, 1
        %s270 = smul.addr %s269, 8
        %s271 = scalar_lea.vmem [#allocation2], %s270
        // Predicated region
        $region45: #{tpu_custom_call.1} parent=43 // pred_check
          %p272 = pneg %p47
        $region46: #{tpu_custom_call.1} parent=43 // pred_check_branch
          %274 = sbr.rel (%p272) target = $region48
        $region47: #{tpu_custom_call.1} parent=43 // pred_region
          %275 = dma.done %s268, 128
        $region48: #{tpu_custom_call.1} parent=43 // pred_fallthru
          _
        %s276 = sand.u32 %s26, 1
        %s277 = scalar_lea.sflag [#allocation6], %s276
        %s278 = sand.u32 %s60, 1
        %s279 = smul.addr %s278, 8
        %s280 = scalar_lea.vmem [#allocation5], %s279
        // Predicated region
        $region49: #{tpu_custom_call.1} parent=43 // pred_check
          %p281 = pneg %p73
        $region50: #{tpu_custom_call.1} parent=43 // pred_check_branch
          %283 = sbr.rel (%p281) target = $region52
        $region51: #{tpu_custom_call.1} parent=43 // pred_region
          %284 = dma.done %s277, 128
        $region52: #{tpu_custom_call.1} parent=43 // pred_fallthru
          _
        // Predicated region
        $region53: #{tpu_custom_call.1} parent=43 // pred_check
          %p285 = pneg %p94
        $region54: #{tpu_custom_call.1} parent=43 // pred_check_branch
          %287 = sbr.rel (%p285) target = $region56
        $region55: #{tpu_custom_call.1} parent=43 // pred_region
          %288 = dma.done [#allocation6], 256
        $region56: #{tpu_custom_call.1} parent=43 // pred_fallthru
          _
        %s289 = sand.u32 %s34, 1
        %s290 = scalar_lea.sflag [#allocation3], %s289
        %s291 = sand.u32 %s34, 1
        %s292 = smul.addr %s291, 8
        %s293 = scalar_lea.vmem [#allocation2], %s292
        %p294 = pneg %p47
        %p295 = pneg %p44
        %s296 = sand.u32 %s26, 1
        %s297 = scalar_lea.sflag [#allocation6], %s296
        %s298 = sand.u32 %s60, 1
        %s299 = smul.addr %s298, 8
        %s300 = scalar_lea.vmem [#allocation5], %s299
        %p301 = pneg %p73
        %p302 = pneg %p70
        %p303 = pneg %p94
        %p304 = pneg %p91
        %p305 = pneg %p115
        %p306 = pneg %p112
        %p307 = pneg %p136
        %p308 = pneg %p133
        %p309 = pneg %p157
        %p310 = pneg %p154
        %p311 = pneg %p183
        %p312 = pneg %p180
        %s313 = sand.u32 %s170, 1
        %s314 = scalar_lea.sflag [#allocation4], %s313
        %s315 = sand.u32 %s170, 1
        %s316 = smul.addr %s315, 8
        %s317 = scalar_lea.vmem [#allocation8], %s316
        %v319 = vld [vmem:[%s280] sm:$0xff]
        %vm320 = vcmask 261120
        %v321 = vsel %vm320, %v319, 0.0
        %322 = vadd.xlane.f32.xlu0 %v321
        %v323 = vpop.xlane.xlu0 %322
        %v324 = vrcp.pop 32.0
        %v325 = vmul.f32 %v323, %v324
        %v326 = vsub.f32 %v319, %v325
        %v327 = vmul.f32 %v326, %v326
        %v328 = vsel %vm320, %v327, 0.0
        %329 = vadd.xlane.f32.xlu0 %v328
        %v330 = vpop.xlane.xlu0 %329
        %v331 = vmul.f32 %v330, %v324
        %v332 = vadd.f32 %v331, 1e-12
        %v333 = vrsqrt.pop %v332
        %v334 = vmul.f32 %v326, %v333
        %v335 = vld [vmem:[%s4] sm:$0x1]
        %v337 = vlaneseq
        %v338 = vshrl.u32 %v337, 7
        %v339 = vsub.s32 0, %v338
        %v340 = vrot.slane %v335, %v339
        %v342 = vmul.f32 %v334, %v340
        %v343 = vld [vmem:[%s5] sm:$0x1]
        %v345 = vlaneseq
        %v346 = vshrl.u32 %v345, 7
        %v347 = vsub.s32 0, %v346
        %v348 = vrot.slane %v343, %v347
        %v350 = vadd.f32 %v342, %v348
        %v351 = vpack.c.bf16 %v350, %v350
        %v352 = vld [vmem:[#allocation7] sm:$0xf]
        %v353 = vld [vmem:[#allocation7 + $0x4] sm:$0xf]
        %v354 = vld [vmem:[#allocation7 + $0x8] sm:$0xf]
        %v355 = vld [vmem:[#allocation7 + $0xc] sm:$0xf]
        %v356 = vld [vmem:[%s3] sm:$0x1]
        %v358 = vlaneseq
        %v359 = vshrl.u32 %v358, 7
        %v360 = vsub.s32 0, %v359
        %v361 = vrot.slane %v356, %v360
        %v367 = vunpack.c.l.b16 %v352
        %v368 = vunpack.c.l.b16 %v353
        %v369 = vunpack.c.l.b16 %v354
        %v370 = vunpack.c.l.b16 %v355
        %v371 = vpack.c.b16 %v368, %v367
        %v372 = vpack.c.b16 %v370, %v369
        %v376 = vsel %vm320, %v351, 0
        %378 = vmatprep.subr.bf16.mxu0 0
        %379 = vmatpush1.bf16.msra.mxu0 %v371
        %380 = vmatprep.subr.bf16.mxu0 0
        %381 = vmatpush1.bf16.msra.mxu0 %v372
        %382 = vmatprep.subr.bf16.mxu0 0
        %383 = vmatpush1.bf16.msra.mxu0 0
        %384 = vmatprep.subr.bf16.mxu0 0
        %385 = vmatpush1.bf16.msra.mxu0 0
        %386 = vmatprep.subr.bf16.mxu0 0
        %387 = vmatpush1.bf16.msra.mxu0 0
        %388 = vmatprep.subr.bf16.mxu0 0
        %389 = vmatpush1.bf16.msra.mxu0 0
        %390 = vmatprep.subr.bf16.mxu0 0
        %391 = vmatpush1.bf16.msra.mxu0 0
        %392 = vmatprep.subr.bf16.mxu0 0
        %393 = vmatpush1.bf16.msra.mxu0 0
        %394 = vmatprep.subr.bf16.mxu0 0
        %395 = vmatpush1.bf16.msra.mxu0 0
        %396 = vmatprep.subr.bf16.mxu0 0
        %397 = vmatpush1.bf16.msra.mxu0 0
        %398 = vmatprep.subr.bf16.mxu0 0
        %399 = vmatpush1.bf16.msra.mxu0 0
        %400 = vmatprep.subr.bf16.mxu0 0
        %401 = vmatpush1.bf16.msra.mxu0 0
        %402 = vmatprep.subr.bf16.mxu0 0
        %403 = vmatpush1.bf16.msra.mxu0 0
        %404 = vmatprep.subr.bf16.mxu0 0
        %405 = vmatpush1.bf16.msra.mxu0 0
        %406 = vmatprep.subr.bf16.mxu0 0
        %407 = vmatpush1.bf16.msra.mxu0 0
        %408 = vmatprep.subr.bf16.mxu0 0
        %409 = vmatpush1.bf16.msra.mxu0 0
        %410 = vmatprep.mubr.bf16.mxu0 0
        %411 = vmatmul.mubr.bf16.gmra.mrb[0].mxu0 %v376
        %v412 = vpop.f32.mrb[0].mxu0
        %v413 = vadd.f32 %v361, %v412
        %v414 = vpop.f32.mrb[0].mxu0
        %v415 = vpop.f32.mrb[0].mxu0
        %v416 = vpop.f32.mrb[0].mxu0
        %417 = vdwg.mxu0
        %v418 = vmul.f32 %v413, 0.5
        %v419 = vmul.f32 %v413, 0.70710677
        %v420 = verf.f32.pop %v419
        %v421 = vadd.f32 %v420, 1.0
        %v422 = vmul.f32 %v418, %v421
        %v423 = vld [vmem:[%s271] sm:$0xff]
        %v424 = vadd.f32 %v423, %v422
        %425 = vst.msk [vmem:[%s317] sm:$0xff] %vm320, %v424
        %s426 = sand.u32 %s170, 1
        %s427 = scalar_lea.sflag [#allocation4], %s426
        %s428 = sand.u32 %s170, 1
        %s429 = smul.addr %s428, 8
        %s430 = scalar_lea.vmem [#allocation8], %s429
        // Predicated region
        $region57: #{tpu_custom_call.1} parent=43 // pred_check
          %p431 = pneg %p180
        $region58: #{tpu_custom_call.1} parent=43 // pred_check_branch
          %433 = sbr.rel (%p431) target = $region60
        $region59: #{tpu_custom_call.1} parent=43 // pred_region
          %s435 = ssub.s32 128, 128
          %436 = vsyncadd %s427, %s435
          %s437 = smul.addr %s26, 128
          %s438 = scalar_lea.hbm %s6, %s437
          %s440 = sshll.u32 %s430, 4
          %s441 = int_to_ptr.vmem [resolvable:$true] %s440
          %443 = dma.vmem_to_hbm [thread:$0]  %s441, 128, %s438, %s427
        $region60: #{tpu_custom_call.1} parent=43 // pred_fallthru
          _
      $region44: #{tpu_custom_call.1} parent=5 // pred_fallthru
        _
      %p444 = scmp.le.s32.totalorder 2, %s21
      // Predicated region
      $region61: #{tpu_custom_call.1} parent=5 // pred_check
        %p445 = pneg %p444
      $region62: #{tpu_custom_call.1} parent=5 // pred_check_branch
        %447 = sbr.rel (%p445) target = $region64
      $region63: #{tpu_custom_call.1} parent=5 // pred_region
        %s448 = ssub.s32 %s21, 2
        // Predicated region
        $region65: #{tpu_custom_call.1} parent=63 // pred_check
          %p449 = pneg %p186
        $region66: #{tpu_custom_call.1} parent=63 // pred_check_branch
          %451 = sbr.rel (%p449) target = $region68
        $region67: #{tpu_custom_call.1} parent=63 // pred_region
          %s452 = sand.u32 %s171, 1
          %s453 = scalar_lea.sflag [#allocation4], %s452
          %s454 = sand.u32 %s171, 1
          %s455 = smul.addr %s454, 8
          %s456 = scalar_lea.vmem [#allocation8], %s455
          %457 = dma.done %s453, 128
        $region68: #{tpu_custom_call.1} parent=63 // pred_fallthru
          _
      $region64: #{tpu_custom_call.1} parent=5 // pred_fallthru
        _
    $region6: #{tpu_custom_call.1} parent=1 // loop_footer
      %s25 = sadd.s32 1, %s21
    $region7: #{tpu_custom_call.1} parent=1 // loop_footer_branch
      %20 = sbr.rel target = $region3
    $region8: #{tpu_custom_call.1} parent=1 // loop_exit
      _
    %458 = vsyncpa [#allocation3], 1
    %s459 = scalar_lea.sflag [#allocation3], 1
    %460 = vsyncpa %s459, 1
    %461 = vsyncpa [#allocation6], 1
    %s462 = scalar_lea.sflag [#allocation6], 1
    %463 = vsyncpa %s462, 1
    %464 = vsyncpa [#allocation4], 1
    %s465 = scalar_lea.sflag [#allocation4], 1
    %466 = vsyncpa %s465, 1

</llo_original>
